<compile_context>
chip_gen: v5e
topology: v5e:2x2
jax: 0.10.0
libtpu: 0.0.40
codegen_flags: <defaults>
</compile_context>

<pallas_src>
import functools

import jax
import jax.numpy as jnp
from jax.experimental import pallas as pl
from jax.experimental.pallas import tpu as pltpu


def _round_up(n, m):
    return ((n + m - 1) // m) * m


def _pad_dim(d, param_dtype):
    """Lane-dense padded width for a feature dim.

    128 lanes always; large bf16 layers are rounded to 256 so v6e/v7x's
    256-wide MXU tiles are filled.
    """
    if param_dtype == jnp.bfloat16 and d > 128:
        return _round_up(d, 256)
    return _round_up(d, 128)


def _sublane_multiple(param_dtype):
    # bf16 packs 16 rows per sublane pair; f32 packs 8.
    return 16 if param_dtype == jnp.bfloat16 else 8


def prepare_fcq_params(params, param_dtype=jnp.bfloat16):
    """One-time packing: zero-pad each layer to lane-dense per-layer widths.

    params: list of (W, b) with W shaped (in, out), b shaped (out,).
    Returns (weights_tuple, biases_tuple) ready for fcq_forward.  Zero padding
    is semantics-preserving through matmul + bias + ReLU.
    """
    ws, bs = [], []
    for w, b in params:
        kin, kout = w.shape
        kin_p = _pad_dim(kin, param_dtype)
        kout_p = _pad_dim(kout, param_dtype)
        wp = jnp.pad(w.astype(param_dtype),
                     ((0, kin_p - kin), (0, kout_p - kout)))
        bp = jnp.pad(b.astype(jnp.float32), (0, kout_p - kout)).reshape(1, kout_p)
        ws.append(wp)
        bs.append(bp)
    return tuple(ws), tuple(bs)


def _fcq_kernel(num_layers, compute_dtype, *refs):
    """Fused MLP forward on one batch tile.

    refs = (x_ref,                          (TB, K0_p)  f32 activation tile
            w_0 ... w_{L-1},                (Ki_p, Ni_p) resident weights
            b_0 ... b_{L-1},                (1, Ni_p)   resident biases (f32)
            out_ref)                        (TB, N_{L-1}_p) padded output tile
    """
    x_ref = refs[0]
    w_refs = refs[1:1 + num_layers]
    b_refs = refs[1 + num_layers:1 + 2 * num_layers]
    out_ref = refs[1 + 2 * num_layers]

    h = x_ref[...]
    # Per-layer shapes differ, so the static Python loop is required (it also
    # stays tiny: 2-4 layers for a Q-network).
    for i in range(num_layers):
        # MXU matmul in compute_dtype (bf16 or f32), f32 accumulation.
        y = jnp.dot(h.astype(compute_dtype), w_refs[i][...],
                    preferred_element_type=jnp.float32) + b_refs[i][...]
        # Hidden layers: ReLU in f32 on the VPU; output layer: no activation.
        h = jnp.maximum(y, 0.0) if i < num_layers - 1 else y

    out_ref[...] = h.astype(out_ref.dtype)


def _choose_batch_tile(batch, sub_mult, batch_tile):
    if batch_tile is not None:
        return max(sub_mult, _round_up(batch_tile, sub_mult))
    tb = min(512, _round_up(batch, sub_mult))
    # v7x has 2 TensorCores: when the batch allows, pick tb so the "parallel"
    # batch axis has at least 2 grid steps and both cores get work.
    if _round_up(batch, tb) // tb < 2 and batch > 2 * sub_mult:
        tb = max(sub_mult, _round_up((batch + 1) // 2, sub_mult))
    return tb


def fcq_forward(x, ws, bs, *, num_actions=None, batch_tile=None):
    """Forward pass using pre-packed parameters from prepare_fcq_params.

    x:  (batch, in_features) — padded here (cheap, fuses under jit).
    ws: tuple of (Ki_p, Ni_p) padded weights (bf16 or f32).
    bs: tuple of (1, Ni_p) padded f32 biases.
    """
    batch, in_features = x.shape
    num_layers = len(ws)
    compute_dtype = ws[0].dtype
    k0_p = ws[0].shape[0]
    nout_p = ws[-1].shape[1]
    if num_actions is None:
        num_actions = nout_p

    sub_mult = _sublane_multiple(compute_dtype)
    tb = _choose_batch_tile(batch, sub_mult, batch_tile)
    b_pad = _round_up(max(batch, 1), tb)
    grid = (b_pad // tb,)

    # Pad activations: rows (sublanes) to b_pad, cols (lanes) to K0_p.
    x_p = jnp.pad(x.astype(jnp.float32),
                  ((0, b_pad - batch), (0, k0_p - in_features)))

    itemsize = jnp.dtype(compute_dtype).itemsize
    param_bytes = (sum(w.shape[0] * w.shape[1] * itemsize for w in ws)
                   + sum(b.shape[1] * 4 for b in bs))
    max_width = max([k0_p] + [w.shape[1] for w in ws])
    # x/out tiles are pipelined (2 buffers each); params are Buffered(1);
    # ~3 f32 temps + 1 cast temp per live layer inside the body.
    vmem_needed = (2 * tb * k0_p * 4
                   + 2 * tb * nout_p * 4
                   + param_bytes
                   + tb * max_width * (3 * 4 + itemsize))
    vmem_limit = int(min(max(vmem_needed * 3 // 2 + (1 << 20), 16 << 20), 64 << 20))

    # Advisory cost hint so XLA can overlap this call with the rest of the step.
    flops = 2 * b_pad * sum(w.shape[0] * w.shape[1] for w in ws)
    bytes_accessed = (b_pad * k0_p * 4 + param_bytes + b_pad * nout_p * 4)
    cost = pl.CostEstimate(flops=flops, transcendentals=0,
                           bytes_accessed=bytes_accessed)

    kernel = functools.partial(_fcq_kernel, num_layers, compute_dtype)

    in_specs = [
        # Batch-tiled activations: pipelined across grid steps.
        pl.BlockSpec((tb, k0_p), lambda i: (i, 0)),
    ]
    # Resident weights: constant index_map, single-buffered (no overlap gain
    # from double-buffering, halves their VMEM footprint).
    for w in ws:
        in_specs.append(pl.BlockSpec(w.shape, lambda i: (0, 0),
                                     pipeline_mode=pl.Buffered(1)))
    for b in bs:
        in_specs.append(pl.BlockSpec(b.shape, lambda i: (0, 0),
                                     pipeline_mode=pl.Buffered(1)))

    out_padded = pl.pallas_call(
        kernel,
        out_shape=jax.ShapeDtypeStruct((b_pad, nout_p), jnp.float32),
        grid=grid,
        in_specs=in_specs,
        out_specs=pl.BlockSpec((tb, nout_p), lambda i: (i, 0)),
        compiler_params=pltpu.CompilerParams(
            dimension_semantics=("parallel",),
            vmem_limit_bytes=vmem_limit),
        cost_estimate=cost,
    )(x_p, *ws, *bs)

    # Strip batch and lane padding.
    return out_padded[:batch, :num_actions]


def init_fcq_params(key, states_input_size, actions_size, hidden_layers):
    """Deterministic init mirroring torch.nn.Linear default (uniform +/-1/sqrt(fan_in))."""
    params = []
    prev = states_input_size
    sizes = list(hidden_layers) + [actions_size]
    for layer_size in sizes:
        key, kw, kb = jax.random.split(key, 3)
        bound = 1.0 / jnp.sqrt(prev)
        w = jax.random.uniform(kw, (prev, layer_size), jnp.float32, -bound, bound)
        b = jax.random.uniform(kb, (layer_size,), jnp.float32, -bound, bound)
        params.append((w, b))
        prev = layer_size
    return params


def fcq_reference(x, params, param_dtype=jnp.float32):
    """Plain-JAX reference applying the same dtype policy as the kernel."""
    h = x.astype(jnp.float32)
    for idx, (w, b) in enumerate(params):
        y = jnp.dot(h.astype(param_dtype), w.astype(param_dtype),
                    preferred_element_type=jnp.float32) + b.astype(jnp.float32)
        h = jnp.maximum(y, 0.0) if idx < len(params) - 1 else y
    return h


if __name__ == "__main__":
    # Small shapes consistent with the module: a batch of state vectors.
    batch = 2
    states_input_size = 16
    hidden_layers = (32, 32)
    actions_size = 4

    key = jax.random.PRNGKey(0)
    key, kx = jax.random.split(key)
    x = jax.random.normal(kx, (batch, states_input_size), jnp.float32)
    params = init_fcq_params(key, states_input_size, actions_size, hidden_layers)

    fwd = jax.jit(functools.partial(fcq_forward, num_actions=actions_size))

    # Default bf16 weight-storage path (f32 accumulation / bias / ReLU),
    # compared against a reference that applies the same casts.
    ws_bf16, bs_bf16 = prepare_fcq_params(params, jnp.bfloat16)   # one-time prep
    out_bf16 = jax.block_until_ready(fwd(x, ws_bf16, bs_bf16))
    ref_bf16 = fcq_reference(x, params, jnp.bfloat16)
    assert out_bf16.shape == (batch, actions_size)
    assert jnp.allclose(out_bf16, ref_bf16, atol=1e-2, rtol=1e-2), "bf16 mismatch vs reference"

    # f32 debug path: tight match against the plain-JAX reference.
    ws_f32, bs_f32 = prepare_fcq_params(params, jnp.float32)
    out_f32 = jax.block_until_ready(fwd(x, ws_f32, bs_f32))
    ref_f32 = fcq_reference(x, params, jnp.float32)
    assert out_f32.shape == (batch, actions_size)
    assert jnp.allclose(out_f32, ref_f32, atol=1e-5, rtol=1e-5), "f32 mismatch vs reference"

    print("KERNEL_OK")
</pallas_src>

<mosaic_0001>
module attributes {stable_mosaic.version = 11 : i64} {
  func.func @_fcq_kernel(%arg0: i32, %arg1: memref<16x128xf32, #tpu.memory_space<vmem>>, %arg2: memref<128x128xbf16, #tpu.memory_space<vmem>>, %arg3: memref<128x128xbf16, #tpu.memory_space<vmem>>, %arg4: memref<128x128xbf16, #tpu.memory_space<vmem>>, %arg5: memref<1x128xf32, #tpu.memory_space<vmem>>, %arg6: memref<1x128xf32, #tpu.memory_space<vmem>>, %arg7: memref<1x128xf32, #tpu.memory_space<vmem>>, %arg8: memref<16x128xf32, #tpu.memory_space<vmem>>) attributes {dimension_semantics = [#tpu.dimension_semantics<parallel>], iteration_bounds = array<i64: 1>, scalar_prefetch = 0 : i64, scratch_operands = 0 : i64, tpu.core_type = #tpu.core_type<tc>, window_params = [{transform_indices = @transform_0, window_bounds = array<i64: 16, 128>}, {pipeline_mode = #tpu.pipeline_mode<synchronous>, transform_indices = @transform_1, window_bounds = array<i64: 128, 128>}, {pipeline_mode = #tpu.pipeline_mode<synchronous>, transform_indices = @transform_2, window_bounds = array<i64: 128, 128>}, {pipeline_mode = #tpu.pipeline_mode<synchronous>, transform_indices = @transform_3, window_bounds = array<i64: 128, 128>}, {pipeline_mode = #tpu.pipeline_mode<synchronous>, transform_indices = @transform_4, window_bounds = array<i64: 1, 128>}, {pipeline_mode = #tpu.pipeline_mode<synchronous>, transform_indices = @transform_5, window_bounds = array<i64: 1, 128>}, {pipeline_mode = #tpu.pipeline_mode<synchronous>, transform_indices = @transform_6, window_bounds = array<i64: 1, 128>}, {transform_indices = @transform_7, window_bounds = array<i64: 16, 128>}]} {
    %c0 = arith.constant 0 : index
    %c0_0 = arith.constant 0 : index
    %0 = vector.load %arg1[%c0, %c0_0] : memref<16x128xf32, #tpu.memory_space<vmem>>, vector<16x128xf32>
    %1 = arith.truncf %0 : vector<16x128xf32> to vector<16x128xbf16>
    %c0_1 = arith.constant 0 : index
    %c0_2 = arith.constant 0 : index
    %2 = vector.load %arg2[%c0_1, %c0_2] : memref<128x128xbf16, #tpu.memory_space<vmem>>, vector<128x128xbf16>
    %cst = arith.constant dense<0.000000e+00> : vector<16x128xf32>
    %3 = tpu.matmul %1, %2, %cst {dimension_numbers = #tpu.dot_dimension_numbers<[1], [0], [0], [1], [0, 0, 1, 1], [], []>} : vector<16x128xbf16>, vector<128x128xbf16>, vector<16x128xf32> -> vector<16x128xf32>
    %c0_3 = arith.constant 0 : index
    %c0_4 = arith.constant 0 : index
    %4 = vector.load %arg5[%c0_3, %c0_4] : memref<1x128xf32, #tpu.memory_space<vmem>>, vector<1x128xf32>
    %5 = vector.broadcast %4 : vector<1x128xf32> to vector<16x128xf32>
    %6 = arith.addf %3, %5 : vector<16x128xf32>
    %cst_5 = arith.constant 0.000000e+00 : f32
    %7 = vector.broadcast %cst_5 : f32 to vector<16x128xf32>
    %8 = arith.maximumf %6, %7 : vector<16x128xf32>
    %9 = arith.truncf %8 : vector<16x128xf32> to vector<16x128xbf16>
    %c0_6 = arith.constant 0 : index
    %c0_7 = arith.constant 0 : index
    %10 = vector.load %arg3[%c0_6, %c0_7] : memref<128x128xbf16, #tpu.memory_space<vmem>>, vector<128x128xbf16>
    %cst_8 = arith.constant dense<0.000000e+00> : vector<16x128xf32>
    %11 = tpu.matmul %9, %10, %cst_8 {dimension_numbers = #tpu.dot_dimension_numbers<[1], [0], [0], [1], [0, 0, 1, 1], [], []>} : vector<16x128xbf16>, vector<128x128xbf16>, vector<16x128xf32> -> vector<16x128xf32>
    %c0_9 = arith.constant 0 : index
    %c0_10 = arith.constant 0 : index
    %12 = vector.load %arg6[%c0_9, %c0_10] : memref<1x128xf32, #tpu.memory_space<vmem>>, vector<1x128xf32>
    %13 = vector.broadcast %12 : vector<1x128xf32> to vector<16x128xf32>
    %14 = arith.addf %11, %13 : vector<16x128xf32>
    %cst_11 = arith.constant 0.000000e+00 : f32
    %15 = vector.broadcast %cst_11 : f32 to vector<16x128xf32>
    %16 = arith.maximumf %14, %15 : vector<16x128xf32>
    %17 = arith.truncf %16 : vector<16x128xf32> to vector<16x128xbf16>
    %c0_12 = arith.constant 0 : index
    %c0_13 = arith.constant 0 : index
    %18 = vector.load %arg4[%c0_12, %c0_13] : memref<128x128xbf16, #tpu.memory_space<vmem>>, vector<128x128xbf16>
    %cst_14 = arith.constant dense<0.000000e+00> : vector<16x128xf32>
    %19 = tpu.matmul %17, %18, %cst_14 {dimension_numbers = #tpu.dot_dimension_numbers<[1], [0], [0], [1], [0, 0, 1, 1], [], []>} : vector<16x128xbf16>, vector<128x128xbf16>, vector<16x128xf32> -> vector<16x128xf32>
    %c0_15 = arith.constant 0 : index
    %c0_16 = arith.constant 0 : index
    %20 = vector.load %arg7[%c0_15, %c0_16] : memref<1x128xf32, #tpu.memory_space<vmem>>, vector<1x128xf32>
    %21 = vector.broadcast %20 : vector<1x128xf32> to vector<16x128xf32>
    %22 = arith.addf %19, %21 : vector<16x128xf32>
    %c0_17 = arith.constant 0 : index
    %c0_18 = arith.constant 0 : index
    %23 = vector.load %arg8[%c0_17, %c0_18] : memref<16x128xf32, #tpu.memory_space<vmem>>, vector<16x128xf32>
    tpu.vector_store %arg8[%c0_17, %c0_18], %22 {strides = array<i32>} : memref<16x128xf32, #tpu.memory_space<vmem>>, vector<16x128xf32>,
    return
  }
  func.func @transform_0(%arg0: i32) -> (i32, i32) {
    %c0_i32 = arith.constant 0 : i32
    %c0_i32_0 = arith.constant 0 : i32
    return %arg0, %c0_i32 : i32, i32
  }
  func.func @transform_1(%arg0: i32) -> (i32, i32) {
    %c0_i32 = arith.constant 0 : i32
    %c0_i32_0 = arith.constant 0 : i32
    %c0_i32_1 = arith.constant 0 : i32
    return %c0_i32, %c0_i32_0 : i32, i32
  }
  func.func @transform_2(%arg0: i32) -> (i32, i32) {
    %c0_i32 = arith.constant 0 : i32
    %c0_i32_0 = arith.constant 0 : i32
    %c0_i32_1 = arith.constant 0 : i32
    return %c0_i32, %c0_i32_0 : i32, i32
  }
  func.func @transform_3(%arg0: i32) -> (i32, i32) {
    %c0_i32 = arith.constant 0 : i32
    %c0_i32_0 = arith.constant 0 : i32
    %c0_i32_1 = arith.constant 0 : i32
    return %c0_i32, %c0_i32_0 : i32, i32
  }
  func.func @transform_4(%arg0: i32) -> (i32, i32) {
    %c0_i32 = arith.constant 0 : i32
    %c0_i32_0 = arith.constant 0 : i32
    %c0_i32_1 = arith.constant 0 : i32
    return %c0_i32, %c0_i32_0 : i32, i32
  }
  func.func @transform_5(%arg0: i32) -> (i32, i32) {
    %c0_i32 = arith.constant 0 : i32
    %c0_i32_0 = arith.constant 0 : i32
    %c0_i32_1 = arith.constant 0 : i32
    return %c0_i32, %c0_i32_0 : i32, i32
  }
  func.func @transform_6(%arg0: i32) -> (i32, i32) {
    %c0_i32 = arith.constant 0 : i32
    %c0_i32_0 = arith.constant 0 : i32
    %c0_i32_1 = arith.constant 0 : i32
    return %c0_i32, %c0_i32_0 : i32, i32
  }
  func.func @transform_7(%arg0: i32) -> (i32, i32) {
    %c0_i32 = arith.constant 0 : i32
    %c0_i32_0 = arith.constant 0 : i32
    return %arg0, %c0_i32 : i32, i32
  }
}

</mosaic_0001>

<llo_original>
// kernel: fcq_forward.1
$region0: #{fcq_forward.1}
  #allocation0 [shape = 'u32[]', space=smem, size = 0x4, offset = 0x4, fixed_abs, tag = 'smem constant byte address 0x4 - core index']
  #allocation1 [shape = 'u32[72,128]{1,0:T(1,128)}', space=vmem, size = 0x9000, scoped, tag = 'internal scratch']
  %s0 = inlined_call_operand.vmem [shape: f32[16,128], index: 0, kind: input, shape index: {}]
  %s1 = inlined_call_operand.hbm [shape: bf16[128,128], index: 1, kind: input, shape index: {}]
  %s2 = inlined_call_operand.hbm [shape: bf16[128,128], index: 2, kind: input, shape index: {}]
  %s3 = inlined_call_operand.hbm [shape: bf16[128,128], index: 3, kind: input, shape index: {}]
  %s4 = inlined_call_operand.vmem [shape: f32[1,128], index: 4, kind: input, shape index: {}]
  %s5 = inlined_call_operand.vmem [shape: f32[1,128], index: 5, kind: input, shape index: {}]
  %s6 = inlined_call_operand.vmem [shape: f32[1,128], index: 6, kind: input, shape index: {}]
  %s7 = inlined_call_operand.vmem [shape: f32[16,128], index: 7, kind: output, shape index: {}]
  %s8 = sld [smem:[#allocation0]]
  $region50: #{fcq_forward.1} parent=0
    _
  %s10 = ssub.s32 1, %s8
  %s11 = scalar_select 0, %s10, %s8
  $region1: #{fcq_forward.1} parent=0
    #allocation2 [shape = 'u8[32768]{0}', space=vmem, size = 0x8000, scoped, tag = 'input window, operand 1, single buffered']
    #allocation3 [shape = 's32[1]{0}', space=sflag, size = 0x4, scoped, tag = 'scoped memory for fcq_forward.1']
    #allocation4 [shape = 'u8[32768]{0}', space=vmem, size = 0x8000, scoped, tag = 'input window, operand 2, single buffered']
    #allocation5 [shape = 's32[1]{0}', space=sflag, size = 0x4, scoped, tag = 'scoped memory for fcq_forward.1']
    #allocation6 [shape = 'u8[32768]{0}', space=vmem, size = 0x8000, scoped, tag = 'input window, operand 3, single buffered']
    %12 = vsyncpa [#allocation3], 0
    %13 = vsyncpa [#allocation5], 0
    // Predicated region
    $region2: #{fcq_forward.1} parent=1 // pred_check
      _
    $region3: #{fcq_forward.1} parent=1 // pred_check_branch
      %15 = sbr.rel (0) target = $region5
    $region4: #{fcq_forward.1} parent=1 // pred_region
      _
    $region5: #{fcq_forward.1} parent=1 // pred_fallthru
      _
    // Predicated region
    $region6: #{fcq_forward.1} parent=1 // pred_check
      _
    $region7: #{fcq_forward.1} parent=1 // pred_check_branch
      %17 = sbr.rel (0) target = $region9
    $region8: #{fcq_forward.1} parent=1 // pred_region
      %19 = vsyncadd [#allocation3], 0
      %s20 = sshll.u32 %s1, 4
      %s21 = int_to_ptr.hbm [resolvable:$true] %s20
      %s22 = sshll.u32 [#allocation2], 4
      %s23 = int_to_ptr.vmem [resolvable:$true] %s22
      %28 = dma.hbm_to_vmem [thread:$0]  %s21, 1024, %s23, [#allocation3], 64, 64, 4
    $region9: #{fcq_forward.1} parent=1 // pred_fallthru
      _
    // Predicated region
    $region10: #{fcq_forward.1} parent=1 // pred_check
      _
    $region11: #{fcq_forward.1} parent=1 // pred_check_branch
      %30 = sbr.rel (0) target = $region13
    $region12: #{fcq_forward.1} parent=1 // pred_region
      %32 = vsyncadd [#allocation5], 0
      %s33 = sshll.u32 %s2, 4
      %s34 = int_to_ptr.hbm [resolvable:$true] %s33
      %s35 = sshll.u32 [#allocation4], 4
      %s36 = int_to_ptr.vmem [resolvable:$true] %s35
      %41 = dma.hbm_to_vmem [thread:$0]  %s34, 1024, %s36, [#allocation5], 64, 64, 4
    $region13: #{fcq_forward.1} parent=1 // pred_fallthru
      _
    // Predicated region
    $region14: #{fcq_forward.1} parent=1 // pred_check
      _
    $region15: #{fcq_forward.1} parent=1 // pred_check_branch
      %43 = sbr.rel (0) target = $region17
    $region16: #{fcq_forward.1} parent=1 // pred_region
      %45 = vsyncadd [#allocation5], 0
      %s46 = sshll.u32 %s3, 4
      %s47 = int_to_ptr.hbm [resolvable:$true] %s46
      %s48 = sshll.u32 [#allocation6], 4
      %s49 = int_to_ptr.vmem [resolvable:$true] %s48
      %54 = dma.hbm_to_vmem [thread:$0]  %s47, 1024, %s49, [#allocation5], 64, 64, 4
    $region17: #{fcq_forward.1} parent=1 // pred_fallthru
      _
    // Predicated region
    $region18: #{fcq_forward.1} parent=1 // pred_check
      _
    $region19: #{fcq_forward.1} parent=1 // pred_check_branch
      %56 = sbr.rel (0) target = $region21
    $region20: #{fcq_forward.1} parent=1 // pred_region
      _
    $region21: #{fcq_forward.1} parent=1 // pred_fallthru
      _
    // Predicated region
    $region22: #{fcq_forward.1} parent=1 // pred_check
      _
    $region23: #{fcq_forward.1} parent=1 // pred_check_branch
      %58 = sbr.rel (0) target = $region25
    $region24: #{fcq_forward.1} parent=1 // pred_region
      _
    $region25: #{fcq_forward.1} parent=1 // pred_fallthru
      _
    // Predicated region
    $region26: #{fcq_forward.1} parent=1 // pred_check
      _
    $region27: #{fcq_forward.1} parent=1 // pred_check_branch
      %60 = sbr.rel (0) target = $region29
    $region28: #{fcq_forward.1} parent=1 // pred_region
      _
    $region29: #{fcq_forward.1} parent=1 // pred_fallthru
      _
    // Predicated region
    $region30: #{fcq_forward.1} parent=1 // pred_check
      _
    $region31: #{fcq_forward.1} parent=1 // pred_check_branch
      %62 = sbr.rel (0) target = $region33
    $region32: #{fcq_forward.1} parent=1 // pred_region
      %64 = dma.done [#allocation3], 1024
    $region33: #{fcq_forward.1} parent=1 // pred_fallthru
      _
    // Predicated region
    $region34: #{fcq_forward.1} parent=1 // pred_check
      _
    $region35: #{fcq_forward.1} parent=1 // pred_check_branch
      %66 = sbr.rel (0) target = $region37
    $region36: #{fcq_forward.1} parent=1 // pred_region
      %68 = dma.done [#allocation5], 1024
    $region37: #{fcq_forward.1} parent=1 // pred_fallthru
      _
    // Predicated region
    $region38: #{fcq_forward.1} parent=1 // pred_check
      _
    $region39: #{fcq_forward.1} parent=1 // pred_check_branch
      %70 = sbr.rel (0) target = $region41
    $region40: #{fcq_forward.1} parent=1 // pred_region
      %72 = dma.done [#allocation5], 1024
    $region41: #{fcq_forward.1} parent=1 // pred_fallthru
      _
    %v73 = vld [vmem:[%s0] sm:$0xff]
    %v74 = vld [vmem:[%s0 + $0x8] sm:$0xff]
    %v75 = vpack.c.bf16 %v74, %v73
    %v76 = vld [vmem:[#allocation2] sm:$0xf]
    %v77 = vld [vmem:[#allocation2 + $0x4] sm:$0xf]
    %v78 = vld [vmem:[#allocation2 + $0x8] sm:$0xf]
    %v79 = vld [vmem:[#allocation2 + $0xc] sm:$0xf]
    %v80 = vld [vmem:[#allocation2 + $0x10] sm:$0xf]
    %v81 = vld [vmem:[#allocation2 + $0x14] sm:$0xf]
    %v82 = vld [vmem:[#allocation2 + $0x18] sm:$0xf]
    %v83 = vld [vmem:[#allocation2 + $0x1c] sm:$0xf]
    %v84 = vld [vmem:[#allocation2 + $0x20] sm:$0xf]
    %v85 = vld [vmem:[#allocation2 + $0x24] sm:$0xf]
    %v86 = vld [vmem:[#allocation2 + $0x28] sm:$0xf]
    %v87 = vld [vmem:[#allocation2 + $0x2c] sm:$0xf]
    %v88 = vld [vmem:[#allocation2 + $0x30] sm:$0xf]
    %v89 = vld [vmem:[#allocation2 + $0x34] sm:$0xf]
    %v90 = vld [vmem:[#allocation2 + $0x38] sm:$0xf]
    %v91 = vld [vmem:[#allocation2 + $0x3c] sm:$0xf]
    %v92 = vld [vmem:[%s4] sm:$0x1]
    %v94 = vperm.slane %v92, 0
    %v112 = vunpack.c.l.b16 %v76
    %v113 = vunpack.c.l.b16 %v77
    %v114 = vunpack.c.l.b16 %v78
    %v115 = vunpack.c.l.b16 %v79
    %v116 = vunpack.c.l.b16 %v80
    %v117 = vunpack.c.l.b16 %v81
    %v118 = vunpack.c.l.b16 %v82
    %v119 = vunpack.c.l.b16 %v83
    %v120 = vunpack.c.l.b16 %v84
    %v121 = vunpack.c.l.b16 %v85
    %v122 = vunpack.c.l.b16 %v86
    %v123 = vunpack.c.l.b16 %v87
    %v124 = vunpack.c.l.b16 %v88
    %v125 = vunpack.c.l.b16 %v89
    %v126 = vunpack.c.l.b16 %v90
    %v127 = vunpack.c.l.b16 %v91
    %v128 = vpack.c.b16 %v113, %v112
    %v129 = vpack.c.b16 %v115, %v114
    %v130 = vpack.c.b16 %v117, %v116
    %v131 = vpack.c.b16 %v119, %v118
    %v132 = vpack.c.b16 %v121, %v120
    %v133 = vpack.c.b16 %v123, %v122
    %v134 = vpack.c.b16 %v125, %v124
    %v135 = vpack.c.b16 %v127, %v126
    %144 = vmatpush.bf16.msra.mxu0 %v135
    %145 = vmatpush.bf16.msra.mxu0 %v134
    %146 = vmatpush.bf16.msra.mxu0 %v133
    %147 = vmatpush.bf16.msra.mxu0 %v132
    %148 = vmatpush.bf16.msra.mxu0 %v131
    %149 = vmatpush.bf16.msra.mxu0 %v130
    %150 = vmatpush.bf16.msra.mxu0 %v129
    %151 = vmatpush.bf16.msra.mxu0 %v128
    %152 = vmatmul.bf16.gmra.mxu0 %v75
    %v153 = vpop.f32.mrf.mxu0
    %v154 = vadd.f32 %v94, %v153
    %v155 = vpop.f32.mrf.mxu0
    %v156 = vadd.f32 %v94, %v155
    %157 = vdwg.mxu0
    %v158 = vmax.f32 %v154, 0.0
    %v159 = vmax.f32 %v156, 0.0
    %v160 = vpack.c.bf16 %v159, %v158
    %v161 = vld [vmem:[#allocation4] sm:$0xf]
    %v162 = vld [vmem:[#allocation4 + $0x4] sm:$0xf]
    %v163 = vld [vmem:[#allocation4 + $0x8] sm:$0xf]
    %v164 = vld [vmem:[#allocation4 + $0xc] sm:$0xf]
    %v165 = vld [vmem:[#allocation4 + $0x10] sm:$0xf]
    %v166 = vld [vmem:[#allocation4 + $0x14] sm:$0xf]
    %v167 = vld [vmem:[#allocation4 + $0x18] sm:$0xf]
    %v168 = vld [vmem:[#allocation4 + $0x1c] sm:$0xf]
    %v169 = vld [vmem:[#allocation4 + $0x20] sm:$0xf]
    %v170 = vld [vmem:[#allocation4 + $0x24] sm:$0xf]
    %v171 = vld [vmem:[#allocation4 + $0x28] sm:$0xf]
    %v172 = vld [vmem:[#allocation4 + $0x2c] sm:$0xf]
    %v173 = vld [vmem:[#allocation4 + $0x30] sm:$0xf]
    %v174 = vld [vmem:[#allocation4 + $0x34] sm:$0xf]
    %v175 = vld [vmem:[#allocation4 + $0x38] sm:$0xf]
    %v176 = vld [vmem:[#allocation4 + $0x3c] sm:$0xf]
    %v177 = vld [vmem:[%s5] sm:$0x1]
    %v179 = vperm.slane %v177, 0
    %v197 = vunpack.c.l.b16 %v161
    %v198 = vunpack.c.l.b16 %v162
    %v199 = vunpack.c.l.b16 %v163
    %v200 = vunpack.c.l.b16 %v164
    %v201 = vunpack.c.l.b16 %v165
    %v202 = vunpack.c.l.b16 %v166
    %v203 = vunpack.c.l.b16 %v167
    %v204 = vunpack.c.l.b16 %v168
    %v205 = vunpack.c.l.b16 %v169
    %v206 = vunpack.c.l.b16 %v170
    %v207 = vunpack.c.l.b16 %v171
    %v208 = vunpack.c.l.b16 %v172
    %v209 = vunpack.c.l.b16 %v173
    %v210 = vunpack.c.l.b16 %v174
    %v211 = vunpack.c.l.b16 %v175
    %v212 = vunpack.c.l.b16 %v176
    %v213 = vpack.c.b16 %v198, %v197
    %v214 = vpack.c.b16 %v200, %v199
    %v215 = vpack.c.b16 %v202, %v201
    %v216 = vpack.c.b16 %v204, %v203
    %v217 = vpack.c.b16 %v206, %v205
    %v218 = vpack.c.b16 %v208, %v207
    %v219 = vpack.c.b16 %v210, %v209
    %v220 = vpack.c.b16 %v212, %v211
    %229 = vmatpush.bf16.msra.mxu0 %v220
    %230 = vmatpush.bf16.msra.mxu0 %v219
    %231 = vmatpush.bf16.msra.mxu0 %v218
    %232 = vmatpush.bf16.msra.mxu0 %v217
    %233 = vmatpush.bf16.msra.mxu0 %v216
    %234 = vmatpush.bf16.msra.mxu0 %v215
    %235 = vmatpush.bf16.msra.mxu0 %v214
    %236 = vmatpush.bf16.msra.mxu0 %v213
    %237 = vmatmul.bf16.gmra.mxu0 %v160
    %v238 = vpop.f32.mrf.mxu0
    %v239 = vadd.f32 %v179, %v238
    %v240 = vpop.f32.mrf.mxu0
    %v241 = vadd.f32 %v179, %v240
    %242 = vdwg.mxu0
    %v243 = vmax.f32 %v239, 0.0
    %v244 = vmax.f32 %v241, 0.0
    %v245 = vpack.c.bf16 %v244, %v243
    %v246 = vld [vmem:[#allocation6] sm:$0xf]
    %v247 = vld [vmem:[#allocation6 + $0x4] sm:$0xf]
    %v248 = vld [vmem:[#allocation6 + $0x8] sm:$0xf]
    %v249 = vld [vmem:[#allocation6 + $0xc] sm:$0xf]
    %v250 = vld [vmem:[#allocation6 + $0x10] sm:$0xf]
    %v251 = vld [vmem:[#allocation6 + $0x14] sm:$0xf]
    %v252 = vld [vmem:[#allocation6 + $0x18] sm:$0xf]
    %v253 = vld [vmem:[#allocation6 + $0x1c] sm:$0xf]
    %v254 = vld [vmem:[#allocation6 + $0x20] sm:$0xf]
    %v255 = vld [vmem:[#allocation6 + $0x24] sm:$0xf]
    %v256 = vld [vmem:[#allocation6 + $0x28] sm:$0xf]
    %v257 = vld [vmem:[#allocation6 + $0x2c] sm:$0xf]
    %v258 = vld [vmem:[#allocation6 + $0x30] sm:$0xf]
    %v259 = vld [vmem:[#allocation6 + $0x34] sm:$0xf]
    %v260 = vld [vmem:[#allocation6 + $0x38] sm:$0xf]
    %v261 = vld [vmem:[#allocation6 + $0x3c] sm:$0xf]
    %v262 = vld [vmem:[%s6] sm:$0x1]
    %v264 = vperm.slane %v262, 0
    %v282 = vunpack.c.l.b16 %v246
    %v283 = vunpack.c.l.b16 %v247
    %v284 = vunpack.c.l.b16 %v248
    %v285 = vunpack.c.l.b16 %v249
    %v286 = vunpack.c.l.b16 %v250
    %v287 = vunpack.c.l.b16 %v251
    %v288 = vunpack.c.l.b16 %v252
    %v289 = vunpack.c.l.b16 %v253
    %v290 = vunpack.c.l.b16 %v254
    %v291 = vunpack.c.l.b16 %v255
    %v292 = vunpack.c.l.b16 %v256
    %v293 = vunpack.c.l.b16 %v257
    %v294 = vunpack.c.l.b16 %v258
    %v295 = vunpack.c.l.b16 %v259
    %v296 = vunpack.c.l.b16 %v260
    %v297 = vunpack.c.l.b16 %v261
    %v298 = vpack.c.b16 %v283, %v282
    %v299 = vpack.c.b16 %v285, %v284
    %v300 = vpack.c.b16 %v287, %v286
    %v301 = vpack.c.b16 %v289, %v288
    %v302 = vpack.c.b16 %v291, %v290
    %v303 = vpack.c.b16 %v293, %v292
    %v304 = vpack.c.b16 %v295, %v294
    %v305 = vpack.c.b16 %v297, %v296
    %314 = vmatpush.bf16.msra.mxu0 %v305
    %315 = vmatpush.bf16.msra.mxu0 %v304
    %316 = vmatpush.bf16.msra.mxu0 %v303
    %317 = vmatpush.bf16.msra.mxu0 %v302
    %318 = vmatpush.bf16.msra.mxu0 %v301
    %319 = vmatpush.bf16.msra.mxu0 %v300
    %320 = vmatpush.bf16.msra.mxu0 %v299
    %321 = vmatpush.bf16.msra.mxu0 %v298
    %322 = vmatmul.bf16.gmra.mxu0 %v245
    %v323 = vpop.f32.mrf.mxu0
    %v324 = vadd.f32 %v264, %v323
    %v325 = vpop.f32.mrf.mxu0
    %v326 = vadd.f32 %v264, %v325
    %327 = vdwg.mxu0
    %328 = vst [vmem:[%s7] sm:$0xff] %v324
    %329 = vst [vmem:[%s7 + $0x8] sm:$0xff] %v326
    // Predicated region
    $region42: #{fcq_forward.1} parent=1 // pred_check
      _
    $region43: #{fcq_forward.1} parent=1 // pred_check_branch
      %331 = sbr.rel (0) target = $region45
    $region44: #{fcq_forward.1} parent=1 // pred_region
      _
    $region45: #{fcq_forward.1} parent=1 // pred_fallthru
      _
    // Predicated region
    $region46: #{fcq_forward.1} parent=1 // pred_check
      _
    $region47: #{fcq_forward.1} parent=1 // pred_check_branch
      %333 = sbr.rel (0) target = $region49
    $region48: #{fcq_forward.1} parent=1 // pred_region
      _
    $region49: #{fcq_forward.1} parent=1 // pred_fallthru
      _
    %334 = vsyncpa [#allocation3], 1
    %335 = vsyncpa [#allocation5], 1

</llo_original>
